<compile_context>
chip_gen: v5e
topology: v5e:2x2
jax: 0.10.0
libtpu: 0.0.40
codegen_flags: <defaults>
</compile_context>

<pallas_src>
import jax
import jax.numpy as jnp
import numpy as np
from jax import lax
from jax.experimental import pallas as pl
from jax.experimental.pallas import tpu as pltpu

_LANES = 128  # TPU vreg lane width; classifier output padded to this.


def lstm_classifier_kernel(ids_ref,       # (S,)    int32  SMEM  token ids
                           gate_tbl_ref,  # (V, 4H) f32    VMEM  emb @ W_ih^T + (b_ih+b_hh)
                           w_hh_ref,      # (H, 4H) f32    VMEM  hidden->gate weights (pre-T)
                           w_lab_ref,     # (H,128) f32    VMEM  classifier weights, lane-padded
                           b_lab_ref,     # (1,128) f32    VMEM  classifier bias, pad lanes -1e30
                           out_ref):      # (1,128) f32    VMEM  lane-dense log-probs
    S = ids_ref.shape[0]
    H = w_hh_ref.shape[0]
    H4 = 4 * H

    # Loop-invariant MXU RHS, hoisted once for the whole recurrence.
    w_hh = w_hh_ref[...]                                       # (H, 4H)

    # Embedding lookup fused into the gate projection: gates_x[t] is just a row
    # of the precomputed (V, 4H) table.  These loads depend only on token ids
    # (not on the h/c carry), so the scheduler hoists them off the serial path.
    gx_rows = [gate_tbl_ref[pl.ds(ids_ref[t], 1), :] for t in range(S)]  # S x (1, 4H)

    # Lane mask selecting the g-gate span [2H, 3H) of the packed [i|f|g|o] gates.
    lane = lax.broadcasted_iota(jnp.int32, (1, H4), 1)
    g_mask = (lane >= 2 * H) & (lane < 3 * H)

    h = jnp.zeros((1, H), jnp.float32)
    c = jnp.zeros((1, H), jnp.float32)
    # S is static and tiny -> fully unrolled; all gate slices are static.
    for t in range(S):
        gates = gx_rows[t] + jnp.dot(h, w_hh, preferred_element_type=jnp.float32)
        # Single EUP pass: sigmoid(x) = 0.5 * (1 + tanh(x / 2)).
        tt = jnp.tanh(jnp.where(g_mask, gates, 0.5 * gates))
        act = jnp.where(g_mask, tt, 0.5 * tt + 0.5)            # (1, 4H) [i|f|g|o]
        i_g = act[:, 0 * H:1 * H]
        f_g = act[:, 1 * H:2 * H]
        g_g = act[:, 2 * H:3 * H]
        o_g = act[:, 3 * H:4 * H]
        c = f_g * c + i_g * g_g
        h = o_g * jnp.tanh(c)

    # Classifier + log_softmax, lane-dense over 128 lanes.  Padded label lanes
    # carry bias -1e30, so they contribute exp(.) = 0 to the normalizer.
    y = jnp.dot(h, w_lab_ref[...], preferred_element_type=jnp.float32) + b_lab_ref[...]
    m = jnp.max(y, axis=-1, keepdims=True)
    z = y - m
    lse = jnp.log(jnp.sum(jnp.exp(z), axis=-1, keepdims=True))
    out_ref[...] = z - lse


def prepare_lstm_classifier_params(emb_table, w_ih, w_hh, b_ih, b_hh,
                                   w_label, b_label):
    """One-time (model-load) param prep.  All transposes/casts/fusions happen
    here, NOT on the per-forward-call path."""
    emb = emb_table.astype(jnp.float32)                         # (V, E)
    w_ih = w_ih.astype(jnp.float32)                             # (4H, E)
    H4 = w_ih.shape[0]
    H = H4 // 4
    L = w_label.shape[0]
    if L > _LANES:
        raise ValueError("label_size must be <= 128 for the lane-dense classifier")

    # Frozen embedding folded into the input projection: (V, 4H) gate table.
    bias = (b_ih + b_hh).astype(jnp.float32)[None, :]           # (1, 4H)
    gate_table = emb @ w_ih.T + bias                            # (V, 4H)
    w_hh_t = jnp.transpose(w_hh.astype(jnp.float32))            # (H, 4H)

    # Lane-pad the classifier so the kernel's output store is a full vreg.
    w_lab_pad = jnp.zeros((H, _LANES), jnp.float32).at[:, :L].set(
        jnp.transpose(w_label.astype(jnp.float32)))             # (H, 128)
    b_lab_pad = jnp.full((1, _LANES), -1e30, jnp.float32).at[0, :L].set(
        b_label.astype(jnp.float32))                            # (1, 128)

    return {
        "gate_table": gate_table,
        "w_hh_t": w_hh_t,
        "w_lab_pad": w_lab_pad,
        "b_lab_pad": b_lab_pad,
        "num_labels": L,
    }


def lstm_classifier_forward(sentence, params):
    """sentence: (S,) int token ids; params: output of prepare_lstm_classifier_params."""
    S = int(sentence.shape[0])
    if S < 1:
        raise ValueError("sentence must contain at least one token")
    gate_table = params["gate_table"]                           # (V, 4H)
    w_hh_t = params["w_hh_t"]                                   # (H, 4H)
    w_lab_pad = params["w_lab_pad"]                             # (H, 128)
    b_lab_pad = params["b_lab_pad"]                             # (1, 128)
    L = params["num_labels"]
    H, H4 = w_hh_t.shape

    cost = pl.CostEstimate(
        flops=2 * S * H * H4 + 8 * S * H4 + 2 * H * _LANES + 4 * _LANES,
        transcendentals=S * (H4 + H) + _LANES,
        bytes_accessed=4 * (gate_table.size + w_hh_t.size + w_lab_pad.size
                            + b_lab_pad.size + _LANES + S),
    )

    smem = pl.BlockSpec(memory_space=pltpu.MemorySpace.SMEM)
    vmem = pl.BlockSpec(memory_space=pltpu.MemorySpace.VMEM)
    out_padded = pl.pallas_call(
        lstm_classifier_kernel,
        out_shape=jax.ShapeDtypeStruct((1, _LANES), jnp.float32),
        in_specs=[smem, vmem, vmem, vmem, vmem],
        out_specs=vmem,
        cost_estimate=cost,
    )(sentence.astype(jnp.int32), gate_table, w_hh_t, w_lab_pad, b_lab_pad)
    return out_padded[:, :L]                                    # (1, L) log-probs


def _reference_forward(sentence, emb_table, w_ih, w_hh, b_ih, b_hh,
                       w_label, b_label):
    """Pure-JAX reference matching PyTorch nn.LSTM semantics (batch=1)."""
    H = w_hh.shape[1]
    x_seq = emb_table[sentence]                                 # (S, E)

    def step(carry, x):
        h, c = carry
        gates = x @ w_ih.T + b_ih + h @ w_hh.T + b_hh
        i = jax.nn.sigmoid(gates[0 * H:1 * H])
        f = jax.nn.sigmoid(gates[1 * H:2 * H])
        g = jnp.tanh(gates[2 * H:3 * H])
        o = jax.nn.sigmoid(gates[3 * H:4 * H])
        c_new = f * c + i * g
        h_new = o * jnp.tanh(c_new)
        return (h_new, c_new), h_new

    (h_last, _), _ = jax.lax.scan(step, (jnp.zeros(H), jnp.zeros(H)), x_seq)
    y = h_last @ w_label.T + b_label
    return jax.nn.log_softmax(y)[None, :]


if __name__ == "__main__":
    embedding_dim = 16
    hidden_dim = 32
    vocab_size = 64
    label_size = 8
    seq_len = 8

    key = jax.random.PRNGKey(0)
    ks = jax.random.split(key, 8)
    emb_table = jax.random.normal(ks[0], (vocab_size, embedding_dim), jnp.float32)
    w_ih = 0.1 * jax.random.normal(ks[1], (4 * hidden_dim, embedding_dim), jnp.float32)
    w_hh = 0.1 * jax.random.normal(ks[2], (4 * hidden_dim, hidden_dim), jnp.float32)
    b_ih = 0.1 * jax.random.normal(ks[3], (4 * hidden_dim,), jnp.float32)
    b_hh = 0.1 * jax.random.normal(ks[4], (4 * hidden_dim,), jnp.float32)
    w_label = 0.1 * jax.random.normal(ks[5], (label_size, hidden_dim), jnp.float32)
    b_label = 0.1 * jax.random.normal(ks[6], (label_size,), jnp.float32)
    sentence = jax.random.randint(ks[7], (seq_len,), 0, vocab_size, jnp.int32)

    # One-time model-load prep (gate table, transposes, lane padding).
    params = prepare_lstm_classifier_params(emb_table, w_ih, w_hh, b_ih, b_hh,
                                            w_label, b_label)
    params = jax.tree_util.tree_map(
        lambda x: jax.block_until_ready(x) if isinstance(x, jax.Array) else x, params)

    log_probs = lstm_classifier_forward(sentence, params)
    jax.block_until_ready(log_probs)

    ref = _reference_forward(sentence, emb_table, w_ih, w_hh, b_ih, b_hh,
                             w_label, b_label)
    np.testing.assert_allclose(np.asarray(log_probs), np.asarray(ref),
                               rtol=2e-4, atol=2e-4)
    print("KERNEL_OK")
</pallas_src>

<mosaic_0001>
module attributes {stable_mosaic.version = 11 : i64} {
  func.func @lstm_classifier_kernel(%arg0: memref<8xi32, #tpu.memory_space<smem>>, %arg1: memref<64x128xf32, #tpu.memory_space<vmem>>, %arg2: memref<32x128xf32, #tpu.memory_space<vmem>>, %arg3: memref<32x128xf32, #tpu.memory_space<vmem>>, %arg4: memref<1x128xf32, #tpu.memory_space<vmem>>, %arg5: memref<1x128xf32, #tpu.memory_space<vmem>>) attributes {dimension_semantics = [], scalar_prefetch = 0 : i64, scratch_operands = 0 : i64, tpu.core_type = #tpu.core_type<tc>} {
    %c0 = arith.constant 0 : index
    %c0_0 = arith.constant 0 : index
    %0 = vector.load %arg2[%c0, %c0_0] : memref<32x128xf32, #tpu.memory_space<vmem>>, vector<32x128xf32>
    %c0_1 = arith.constant 0 : index
    %1 = memref.load %arg0[%c0_1] : memref<8xi32, #tpu.memory_space<smem>>
    %2 = arith.index_cast %1 : i32 to index
    %c0_2 = arith.constant 0 : index
    %3 = vector.load %arg1[%2, %c0_2] : memref<64x128xf32, #tpu.memory_space<vmem>>, vector<1x128xf32>
    %c1 = arith.constant 1 : index
    %4 = memref.load %arg0[%c1] : memref<8xi32, #tpu.memory_space<smem>>
    %5 = arith.index_cast %4 : i32 to index
    %c0_3 = arith.constant 0 : index
    %6 = vector.load %arg1[%5, %c0_3] : memref<64x128xf32, #tpu.memory_space<vmem>>, vector<1x128xf32>
    %c2 = arith.constant 2 : index
    %7 = memref.load %arg0[%c2] : memref<8xi32, #tpu.memory_space<smem>>
    %8 = arith.index_cast %7 : i32 to index
    %c0_4 = arith.constant 0 : index
    %9 = vector.load %arg1[%8, %c0_4] : memref<64x128xf32, #tpu.memory_space<vmem>>, vector<1x128xf32>
    %c3 = arith.constant 3 : index
    %10 = memref.load %arg0[%c3] : memref<8xi32, #tpu.memory_space<smem>>
    %11 = arith.index_cast %10 : i32 to index
    %c0_5 = arith.constant 0 : index
    %12 = vector.load %arg1[%11, %c0_5] : memref<64x128xf32, #tpu.memory_space<vmem>>, vector<1x128xf32>
    %c4 = arith.constant 4 : index
    %13 = memref.load %arg0[%c4] : memref<8xi32, #tpu.memory_space<smem>>
    %14 = arith.index_cast %13 : i32 to index
    %c0_6 = arith.constant 0 : index
    %15 = vector.load %arg1[%14, %c0_6] : memref<64x128xf32, #tpu.memory_space<vmem>>, vector<1x128xf32>
    %c5 = arith.constant 5 : index
    %16 = memref.load %arg0[%c5] : memref<8xi32, #tpu.memory_space<smem>>
    %17 = arith.index_cast %16 : i32 to index
    %c0_7 = arith.constant 0 : index
    %18 = vector.load %arg1[%17, %c0_7] : memref<64x128xf32, #tpu.memory_space<vmem>>, vector<1x128xf32>
    %c6 = arith.constant 6 : index
    %19 = memref.load %arg0[%c6] : memref<8xi32, #tpu.memory_space<smem>>
    %20 = arith.index_cast %19 : i32 to index
    %c0_8 = arith.constant 0 : index
    %21 = vector.load %arg1[%20, %c0_8] : memref<64x128xf32, #tpu.memory_space<vmem>>, vector<1x128xf32>
    %c7 = arith.constant 7 : index
    %22 = memref.load %arg0[%c7] : memref<8xi32, #tpu.memory_space<smem>>
    %23 = arith.index_cast %22 : i32 to index
    %c0_9 = arith.constant 0 : index
    %24 = vector.load %arg1[%23, %c0_9] : memref<64x128xf32, #tpu.memory_space<vmem>>, vector<1x128xf32>
    %25 = tpu.iota {dimensions = array<i32: 1>} : vector<1x128xi32>
    %c64_i32 = arith.constant 64 : i32
    %26 = vector.broadcast %c64_i32 : i32 to vector<1x128xi32>
    %27 = arith.cmpi sge, %25, %26 : vector<1x128xi32>
    %c96_i32 = arith.constant 96 : i32
    %28 = vector.broadcast %c96_i32 : i32 to vector<1x128xi32>
    %29 = arith.cmpi slt, %25, %28 : vector<1x128xi32>
    %30 = arith.andi %27, %29 : vector<1x128xi1>
    %cst = arith.constant 0.000000e+00 : f32
    %31 = vector.broadcast %cst : f32 to vector<1x32xf32>
    %cst_10 = arith.constant 0.000000e+00 : f32
    %32 = vector.broadcast %cst_10 : f32 to vector<1x32xf32>
    %cst_11 = arith.constant dense<0.000000e+00> : vector<1x128xf32>
    %33 = tpu.matmul %31, %0, %cst_11 {dimension_numbers = #tpu.dot_dimension_numbers<[1], [0], [0], [1], [0, 0, 1, 1], [], []>} : vector<1x32xf32>, vector<32x128xf32>, vector<1x128xf32> -> vector<1x128xf32>
    %34 = arith.addf %3, %33 : vector<1x128xf32>
    %cst_12 = arith.constant 5.000000e-01 : f32
    %35 = vector.broadcast %cst_12 : f32 to vector<1x128xf32>
    %36 = arith.mulf %35, %34 : vector<1x128xf32>
    %37 = arith.select %30, %34, %36 : vector<1x128xi1>, vector<1x128xf32>
    %38 = math.tanh %37 : vector<1x128xf32>
    %cst_13 = arith.constant 5.000000e-01 : f32
    %39 = vector.broadcast %cst_13 : f32 to vector<1x128xf32>
    %40 = arith.mulf %39, %38 : vector<1x128xf32>
    %cst_14 = arith.constant 5.000000e-01 : f32
    %41 = vector.broadcast %cst_14 : f32 to vector<1x128xf32>
    %42 = arith.addf %40, %41 : vector<1x128xf32>
    %43 = arith.select %30, %38, %42 : vector<1x128xi1>, vector<1x128xf32>
    %44 = vector.extract_strided_slice %43 {offsets = [0, 0], sizes = [1, 32], strides = [1, 1]} : vector<1x128xf32> to vector<1x32xf32>
    %45 = vector.extract_strided_slice %43 {offsets = [0, 32], sizes = [1, 32], strides = [1, 1]} : vector<1x128xf32> to vector<1x32xf32>
    %46 = vector.extract_strided_slice %43 {offsets = [0, 64], sizes = [1, 32], strides = [1, 1]} : vector<1x128xf32> to vector<1x32xf32>
    %47 = vector.extract_strided_slice %43 {offsets = [0, 96], sizes = [1, 32], strides = [1, 1]} : vector<1x128xf32> to vector<1x32xf32>
    %48 = arith.mulf %45, %32 : vector<1x32xf32>
    %49 = arith.mulf %44, %46 : vector<1x32xf32>
    %50 = arith.addf %48, %49 : vector<1x32xf32>
    %51 = math.tanh %50 : vector<1x32xf32>
    %52 = arith.mulf %47, %51 : vector<1x32xf32>
    %cst_15 = arith.constant dense<0.000000e+00> : vector<1x128xf32>
    %53 = tpu.matmul %52, %0, %cst_15 {dimension_numbers = #tpu.dot_dimension_numbers<[1], [0], [0], [1], [0, 0, 1, 1], [], []>} : vector<1x32xf32>, vector<32x128xf32>, vector<1x128xf32> -> vector<1x128xf32>
    %54 = arith.addf %6, %53 : vector<1x128xf32>
    %cst_16 = arith.constant 5.000000e-01 : f32
    %55 = vector.broadcast %cst_16 : f32 to vector<1x128xf32>
    %56 = arith.mulf %55, %54 : vector<1x128xf32>
    %57 = arith.select %30, %54, %56 : vector<1x128xi1>, vector<1x128xf32>
    %58 = math.tanh %57 : vector<1x128xf32>
    %cst_17 = arith.constant 5.000000e-01 : f32
    %59 = vector.broadcast %cst_17 : f32 to vector<1x128xf32>
    %60 = arith.mulf %59, %58 : vector<1x128xf32>
    %cst_18 = arith.constant 5.000000e-01 : f32
    %61 = vector.broadcast %cst_18 : f32 to vector<1x128xf32>
    %62 = arith.addf %60, %61 : vector<1x128xf32>
    %63 = arith.select %30, %58, %62 : vector<1x128xi1>, vector<1x128xf32>
    %64 = vector.extract_strided_slice %63 {offsets = [0, 0], sizes = [1, 32], strides = [1, 1]} : vector<1x128xf32> to vector<1x32xf32>
    %65 = vector.extract_strided_slice %63 {offsets = [0, 32], sizes = [1, 32], strides = [1, 1]} : vector<1x128xf32> to vector<1x32xf32>
    %66 = vector.extract_strided_slice %63 {offsets = [0, 64], sizes = [1, 32], strides = [1, 1]} : vector<1x128xf32> to vector<1x32xf32>
    %67 = vector.extract_strided_slice %63 {offsets = [0, 96], sizes = [1, 32], strides = [1, 1]} : vector<1x128xf32> to vector<1x32xf32>
    %68 = arith.mulf %65, %50 : vector<1x32xf32>
    %69 = arith.mulf %64, %66 : vector<1x32xf32>
    %70 = arith.addf %68, %69 : vector<1x32xf32>
    %71 = math.tanh %70 : vector<1x32xf32>
    %72 = arith.mulf %67, %71 : vector<1x32xf32>
    %cst_19 = arith.constant dense<0.000000e+00> : vector<1x128xf32>
    %73 = tpu.matmul %72, %0, %cst_19 {dimension_numbers = #tpu.dot_dimension_numbers<[1], [0], [0], [1], [0, 0, 1, 1], [], []>} : vector<1x32xf32>, vector<32x128xf32>, vector<1x128xf32> -> vector<1x128xf32>
    %74 = arith.addf %9, %73 : vector<1x128xf32>
    %cst_20 = arith.constant 5.000000e-01 : f32
    %75 = vector.broadcast %cst_20 : f32 to vector<1x128xf32>
    %76 = arith.mulf %75, %74 : vector<1x128xf32>
    %77 = arith.select %30, %74, %76 : vector<1x128xi1>, vector<1x128xf32>
    %78 = math.tanh %77 : vector<1x128xf32>
    %cst_21 = arith.constant 5.000000e-01 : f32
    %79 = vector.broadcast %cst_21 : f32 to vector<1x128xf32>
    %80 = arith.mulf %79, %78 : vector<1x128xf32>
    %cst_22 = arith.constant 5.000000e-01 : f32
    %81 = vector.broadcast %cst_22 : f32 to vector<1x128xf32>
    %82 = arith.addf %80, %81 : vector<1x128xf32>
    %83 = arith.select %30, %78, %82 : vector<1x128xi1>, vector<1x128xf32>
    %84 = vector.extract_strided_slice %83 {offsets = [0, 0], sizes = [1, 32], strides = [1, 1]} : vector<1x128xf32> to vector<1x32xf32>
    %85 = vector.extract_strided_slice %83 {offsets = [0, 32], sizes = [1, 32], strides = [1, 1]} : vector<1x128xf32> to vector<1x32xf32>
    %86 = vector.extract_strided_slice %83 {offsets = [0, 64], sizes = [1, 32], strides = [1, 1]} : vector<1x128xf32> to vector<1x32xf32>
    %87 = vector.extract_strided_slice %83 {offsets = [0, 96], sizes = [1, 32], strides = [1, 1]} : vector<1x128xf32> to vector<1x32xf32>
    %88 = arith.mulf %85, %70 : vector<1x32xf32>
    %89 = arith.mulf %84, %86 : vector<1x32xf32>
    %90 = arith.addf %88, %89 : vector<1x32xf32>
    %91 = math.tanh %90 : vector<1x32xf32>
    %92 = arith.mulf %87, %91 : vector<1x32xf32>
    %cst_23 = arith.constant dense<0.000000e+00> : vector<1x128xf32>
    %93 = tpu.matmul %92, %0, %cst_23 {dimension_numbers = #tpu.dot_dimension_numbers<[1], [0], [0], [1], [0, 0, 1, 1], [], []>} : vector<1x32xf32>, vector<32x128xf32>, vector<1x128xf32> -> vector<1x128xf32>
    %94 = arith.addf %12, %93 : vector<1x128xf32>
    %cst_24 = arith.constant 5.000000e-01 : f32
    %95 = vector.broadcast %cst_24 : f32 to vector<1x128xf32>
    %96 = arith.mulf %95, %94 : vector<1x128xf32>
    %97 = arith.select %30, %94, %96 : vector<1x128xi1>, vector<1x128xf32>
    %98 = math.tanh %97 : vector<1x128xf32>
    %cst_25 = arith.constant 5.000000e-01 : f32
    %99 = vector.broadcast %cst_25 : f32 to vector<1x128xf32>
    %100 = arith.mulf %99, %98 : vector<1x128xf32>
    %cst_26 = arith.constant 5.000000e-01 : f32
    %101 = vector.broadcast %cst_26 : f32 to vector<1x128xf32>
    %102 = arith.addf %100, %101 : vector<1x128xf32>
    %103 = arith.select %30, %98, %102 : vector<1x128xi1>, vector<1x128xf32>
    %104 = vector.extract_strided_slice %103 {offsets = [0, 0], sizes = [1, 32], strides = [1, 1]} : vector<1x128xf32> to vector<1x32xf32>
    %105 = vector.extract_strided_slice %103 {offsets = [0, 32], sizes = [1, 32], strides = [1, 1]} : vector<1x128xf32> to vector<1x32xf32>
    %106 = vector.extract_strided_slice %103 {offsets = [0, 64], sizes = [1, 32], strides = [1, 1]} : vector<1x128xf32> to vector<1x32xf32>
    %107 = vector.extract_strided_slice %103 {offsets = [0, 96], sizes = [1, 32], strides = [1, 1]} : vector<1x128xf32> to vector<1x32xf32>
    %108 = arith.mulf %105, %90 : vector<1x32xf32>
    %109 = arith.mulf %104, %106 : vector<1x32xf32>
    %110 = arith.addf %108, %109 : vector<1x32xf32>
    %111 = math.tanh %110 : vector<1x32xf32>
    %112 = arith.mulf %107, %111 : vector<1x32xf32>
    %cst_27 = arith.constant dense<0.000000e+00> : vector<1x128xf32>
    %113 = tpu.matmul %112, %0, %cst_27 {dimension_numbers = #tpu.dot_dimension_numbers<[1], [0], [0], [1], [0, 0, 1, 1], [], []>} : vector<1x32xf32>, vector<32x128xf32>, vector<1x128xf32> -> vector<1x128xf32>
    %114 = arith.addf %15, %113 : vector<1x128xf32>
    %cst_28 = arith.constant 5.000000e-01 : f32
    %115 = vector.broadcast %cst_28 : f32 to vector<1x128xf32>
    %116 = arith.mulf %115, %114 : vector<1x128xf32>
    %117 = arith.select %30, %114, %116 : vector<1x128xi1>, vector<1x128xf32>
    %118 = math.tanh %117 : vector<1x128xf32>
    %cst_29 = arith.constant 5.000000e-01 : f32
    %119 = vector.broadcast %cst_29 : f32 to vector<1x128xf32>
    %120 = arith.mulf %119, %118 : vector<1x128xf32>
    %cst_30 = arith.constant 5.000000e-01 : f32
    %121 = vector.broadcast %cst_30 : f32 to vector<1x128xf32>
    %122 = arith.addf %120, %121 : vector<1x128xf32>
    %123 = arith.select %30, %118, %122 : vector<1x128xi1>, vector<1x128xf32>
    %124 = vector.extract_strided_slice %123 {offsets = [0, 0], sizes = [1, 32], strides = [1, 1]} : vector<1x128xf32> to vector<1x32xf32>
    %125 = vector.extract_strided_slice %123 {offsets = [0, 32], sizes = [1, 32], strides = [1, 1]} : vector<1x128xf32> to vector<1x32xf32>
    %126 = vector.extract_strided_slice %123 {offsets = [0, 64], sizes = [1, 32], strides = [1, 1]} : vector<1x128xf32> to vector<1x32xf32>
    %127 = vector.extract_strided_slice %123 {offsets = [0, 96], sizes = [1, 32], strides = [1, 1]} : vector<1x128xf32> to vector<1x32xf32>
    %128 = arith.mulf %125, %110 : vector<1x32xf32>
    %129 = arith.mulf %124, %126 : vector<1x32xf32>
    %130 = arith.addf %128, %129 : vector<1x32xf32>
    %131 = math.tanh %130 : vector<1x32xf32>
    %132 = arith.mulf %127, %131 : vector<1x32xf32>
    %cst_31 = arith.constant dense<0.000000e+00> : vector<1x128xf32>
    %133 = tpu.matmul %132, %0, %cst_31 {dimension_numbers = #tpu.dot_dimension_numbers<[1], [0], [0], [1], [0, 0, 1, 1], [], []>} : vector<1x32xf32>, vector<32x128xf32>, vector<1x128xf32> -> vector<1x128xf32>
    %134 = arith.addf %18, %133 : vector<1x128xf32>
    %cst_32 = arith.constant 5.000000e-01 : f32
    %135 = vector.broadcast %cst_32 : f32 to vector<1x128xf32>
    %136 = arith.mulf %135, %134 : vector<1x128xf32>
    %137 = arith.select %30, %134, %136 : vector<1x128xi1>, vector<1x128xf32>
    %138 = math.tanh %137 : vector<1x128xf32>
    %cst_33 = arith.constant 5.000000e-01 : f32
    %139 = vector.broadcast %cst_33 : f32 to vector<1x128xf32>
    %140 = arith.mulf %139, %138 : vector<1x128xf32>
    %cst_34 = arith.constant 5.000000e-01 : f32
    %141 = vector.broadcast %cst_34 : f32 to vector<1x128xf32>
    %142 = arith.addf %140, %141 : vector<1x128xf32>
    %143 = arith.select %30, %138, %142 : vector<1x128xi1>, vector<1x128xf32>
    %144 = vector.extract_strided_slice %143 {offsets = [0, 0], sizes = [1, 32], strides = [1, 1]} : vector<1x128xf32> to vector<1x32xf32>
    %145 = vector.extract_strided_slice %143 {offsets = [0, 32], sizes = [1, 32], strides = [1, 1]} : vector<1x128xf32> to vector<1x32xf32>
    %146 = vector.extract_strided_slice %143 {offsets = [0, 64], sizes = [1, 32], strides = [1, 1]} : vector<1x128xf32> to vector<1x32xf32>
    %147 = vector.extract_strided_slice %143 {offsets = [0, 96], sizes = [1, 32], strides = [1, 1]} : vector<1x128xf32> to vector<1x32xf32>
    %148 = arith.mulf %145, %130 : vector<1x32xf32>
    %149 = arith.mulf %144, %146 : vector<1x32xf32>
    %150 = arith.addf %148, %149 : vector<1x32xf32>
    %151 = math.tanh %150 : vector<1x32xf32>
    %152 = arith.mulf %147, %151 : vector<1x32xf32>
    %cst_35 = arith.constant dense<0.000000e+00> : vector<1x128xf32>
    %153 = tpu.matmul %152, %0, %cst_35 {dimension_numbers = #tpu.dot_dimension_numbers<[1], [0], [0], [1], [0, 0, 1, 1], [], []>} : vector<1x32xf32>, vector<32x128xf32>, vector<1x128xf32> -> vector<1x128xf32>
    %154 = arith.addf %21, %153 : vector<1x128xf32>
    %cst_36 = arith.constant 5.000000e-01 : f32
    %155 = vector.broadcast %cst_36 : f32 to vector<1x128xf32>
    %156 = arith.mulf %155, %154 : vector<1x128xf32>
    %157 = arith.select %30, %154, %156 : vector<1x128xi1>, vector<1x128xf32>
    %158 = math.tanh %157 : vector<1x128xf32>
    %cst_37 = arith.constant 5.000000e-01 : f32
    %159 = vector.broadcast %cst_37 : f32 to vector<1x128xf32>
    %160 = arith.mulf %159, %158 : vector<1x128xf32>
    %cst_38 = arith.constant 5.000000e-01 : f32
    %161 = vector.broadcast %cst_38 : f32 to vector<1x128xf32>
    %162 = arith.addf %160, %161 : vector<1x128xf32>
    %163 = arith.select %30, %158, %162 : vector<1x128xi1>, vector<1x128xf32>
    %164 = vector.extract_strided_slice %163 {offsets = [0, 0], sizes = [1, 32], strides = [1, 1]} : vector<1x128xf32> to vector<1x32xf32>
    %165 = vector.extract_strided_slice %163 {offsets = [0, 32], sizes = [1, 32], strides = [1, 1]} : vector<1x128xf32> to vector<1x32xf32>
    %166 = vector.extract_strided_slice %163 {offsets = [0, 64], sizes = [1, 32], strides = [1, 1]} : vector<1x128xf32> to vector<1x32xf32>
    %167 = vector.extract_strided_slice %163 {offsets = [0, 96], sizes = [1, 32], strides = [1, 1]} : vector<1x128xf32> to vector<1x32xf32>
    %168 = arith.mulf %165, %150 : vector<1x32xf32>
    %169 = arith.mulf %164, %166 : vector<1x32xf32>
    %170 = arith.addf %168, %169 : vector<1x32xf32>
    %171 = math.tanh %170 : vector<1x32xf32>
    %172 = arith.mulf %167, %171 : vector<1x32xf32>
    %cst_39 = arith.constant dense<0.000000e+00> : vector<1x128xf32>
    %173 = tpu.matmul %172, %0, %cst_39 {dimension_numbers = #tpu.dot_dimension_numbers<[1], [0], [0], [1], [0, 0, 1, 1], [], []>} : vector<1x32xf32>, vector<32x128xf32>, vector<1x128xf32> -> vector<1x128xf32>
    %174 = arith.addf %24, %173 : vector<1x128xf32>
    %cst_40 = arith.constant 5.000000e-01 : f32
    %175 = vector.broadcast %cst_40 : f32 to vector<1x128xf32>
    %176 = arith.mulf %175, %174 : vector<1x128xf32>
    %177 = arith.select %30, %174, %176 : vector<1x128xi1>, vector<1x128xf32>
    %178 = math.tanh %177 : vector<1x128xf32>
    %cst_41 = arith.constant 5.000000e-01 : f32
    %179 = vector.broadcast %cst_41 : f32 to vector<1x128xf32>
    %180 = arith.mulf %179, %178 : vector<1x128xf32>
    %cst_42 = arith.constant 5.000000e-01 : f32
    %181 = vector.broadcast %cst_42 : f32 to vector<1x128xf32>
    %182 = arith.addf %180, %181 : vector<1x128xf32>
    %183 = arith.select %30, %178, %182 : vector<1x128xi1>, vector<1x128xf32>
    %184 = vector.extract_strided_slice %183 {offsets = [0, 0], sizes = [1, 32], strides = [1, 1]} : vector<1x128xf32> to vector<1x32xf32>
    %185 = vector.extract_strided_slice %183 {offsets = [0, 32], sizes = [1, 32], strides = [1, 1]} : vector<1x128xf32> to vector<1x32xf32>
    %186 = vector.extract_strided_slice %183 {offsets = [0, 64], sizes = [1, 32], strides = [1, 1]} : vector<1x128xf32> to vector<1x32xf32>
    %187 = vector.extract_strided_slice %183 {offsets = [0, 96], sizes = [1, 32], strides = [1, 1]} : vector<1x128xf32> to vector<1x32xf32>
    %188 = arith.mulf %185, %170 : vector<1x32xf32>
    %189 = arith.mulf %184, %186 : vector<1x32xf32>
    %190 = arith.addf %188, %189 : vector<1x32xf32>
    %191 = math.tanh %190 : vector<1x32xf32>
    %192 = arith.mulf %187, %191 : vector<1x32xf32>
    %c0_43 = arith.constant 0 : index
    %c0_44 = arith.constant 0 : index
    %193 = vector.load %arg3[%c0_43, %c0_44] : memref<32x128xf32, #tpu.memory_space<vmem>>, vector<32x128xf32>
    %cst_45 = arith.constant dense<0.000000e+00> : vector<1x128xf32>
    %194 = tpu.matmul %192, %193, %cst_45 {dimension_numbers = #tpu.dot_dimension_numbers<[1], [0], [0], [1], [0, 0, 1, 1], [], []>} : vector<1x32xf32>, vector<32x128xf32>, vector<1x128xf32> -> vector<1x128xf32>
    %c0_46 = arith.constant 0 : index
    %c0_47 = arith.constant 0 : index
    %195 = vector.load %arg4[%c0_46, %c0_47] : memref<1x128xf32, #tpu.memory_space<vmem>>, vector<1x128xf32>
    %196 = arith.addf %194, %195 : vector<1x128xf32>
    %cst_48 = arith.constant dense<0xFF800000> : vector<1xf32>
    %197 = vector.multi_reduction <maximumf>, %196, %cst_48 [1] : vector<1x128xf32> to vector<1xf32>
    %198 = vector.shape_cast %197 : vector<1xf32> to vector<1x1xf32>
    %199 = vector.broadcast %198 : vector<1x1xf32> to vector<1x128xf32>
    %200 = arith.subf %196, %199 : vector<1x128xf32>
    %201 = math.exp %200 : vector<1x128xf32>
    %cst_49 = arith.constant dense<0.000000e+00> : vector<1xf32>
    %202 = vector.multi_reduction <add>, %201, %cst_49 [1] : vector<1x128xf32> to vector<1xf32>
    %203 = vector.shape_cast %202 : vector<1xf32> to vector<1x1xf32>
    %204 = math.log %203 : vector<1x1xf32>
    %205 = vector.broadcast %204 : vector<1x1xf32> to vector<1x128xf32>
    %206 = arith.subf %200, %205 : vector<1x128xf32>
    %c0_50 = arith.constant 0 : index
    %c0_51 = arith.constant 0 : index
    %207 = vector.load %arg5[%c0_50, %c0_51] : memref<1x128xf32, #tpu.memory_space<vmem>>, vector<1x128xf32>
    tpu.vector_store %arg5[%c0_50, %c0_51], %206 {strides = array<i32>} : memref<1x128xf32, #tpu.memory_space<vmem>>, vector<1x128xf32>,
    return
  }
}

</mosaic_0001>

<llo_original>
// kernel: tpu_custom_call.1
$region0: #{tpu_custom_call.1}
  #allocation0 [shape = 'u32[]', space=smem, size = 0x4, offset = 0x4, fixed_abs, tag = 'smem constant byte address 0x4 - core index']
  #allocation1 [shape = 'u32[72,128]{1,0:T(1,128)}', space=vmem, size = 0x9000, scoped, tag = 'internal scratch']
  %s0 = inlined_call_operand.hbm [shape: s32[8], index: 0, kind: input, shape index: {}]
  %s1 = inlined_call_operand.hbm [shape: f32[64,128], index: 1, kind: input, shape index: {}]
  %s2 = inlined_call_operand.hbm [shape: f32[32,128], index: 2, kind: input, shape index: {}]
  %s3 = inlined_call_operand.hbm [shape: f32[32,128], index: 3, kind: input, shape index: {}]
  %s4 = inlined_call_operand.vmem [shape: f32[1,128], index: 4, kind: input, shape index: {}]
  %s5 = inlined_call_operand.hbm [shape: f32[1,128], index: 5, kind: output, shape index: {}]
  %s6 = sld [smem:[#allocation0]]
  $region46: #{tpu_custom_call.1} parent=0
    _
  %s8 = ssub.s32 1, %s6
  %s9 = scalar_select 0, %s8, %s6
  $region1: #{tpu_custom_call.1} parent=0
    #allocation2 [shape = 'u8[512]{0}', space=smem, size = 0x200, scoped, tag = 'input window, operand 0, single buffered']
    #allocation3 [shape = 's32[1]{0}', space=sflag, size = 0x4, scoped, tag = 'scoped memory for tpu_custom_call.1']
    #allocation4 [shape = 's32[1]{0}', space=sflag, size = 0x4, scoped, tag = 'scoped memory for tpu_custom_call.1']
    #allocation5 [shape = 's32[1]{0}', space=sflag, size = 0x4, scoped, tag = 'scoped memory for tpu_custom_call.1']
    #allocation6 [shape = 'u8[32768]{0}', space=vmem, size = 0x8000, scoped, tag = 'input window, operand 1, single buffered']
    #allocation7 [shape = 'u8[16384]{0}', space=vmem, size = 0x4000, scoped, tag = 'input window, operand 2, single buffered']
    #allocation8 [shape = 's32[1]{0}', space=sflag, size = 0x4, scoped, tag = 'scoped memory for tpu_custom_call.1']
    #allocation9 [shape = 'u8[16384]{0}', space=vmem, size = 0x4000, scoped, tag = 'input window, operand 3, single buffered']
    #allocation10 [shape = 'u8[512]{0}', space=vmem, size = 0x400, scoped, tag = 'output window, operand 0, single buffered']
    %10 = vsyncpa [#allocation5], 0
    %11 = vsyncpa [#allocation3], 0
    %12 = vsyncpa [#allocation8], 0
    %13 = vsyncpa [#allocation4], 0
    // Predicated region
    $region2: #{tpu_custom_call.1} parent=1 // pred_check
      _
    $region3: #{tpu_custom_call.1} parent=1 // pred_check_branch
      %15 = sbr.rel (0) target = $region5
    $region4: #{tpu_custom_call.1} parent=1 // pred_region
      %17 = vsyncadd [#allocation5], 0
      %s19 = sshll.u32 %s0, 4
      %s20 = int_to_ptr.hbm [resolvable:$true] %s19
      %22 = dma.hbm_to_smem %s20, 16, [#allocation2], [#allocation5]
    $region5: #{tpu_custom_call.1} parent=1 // pred_fallthru
      _
    // Predicated region
    $region6: #{tpu_custom_call.1} parent=1 // pred_check
      _
    $region7: #{tpu_custom_call.1} parent=1 // pred_check_branch
      %24 = sbr.rel (0) target = $region9
    $region8: #{tpu_custom_call.1} parent=1 // pred_region
      %26 = vsyncadd [#allocation3], 0
      %s27 = sshll.u32 %s1, 4
      %s28 = int_to_ptr.hbm [resolvable:$true] %s27
      %s29 = sshll.u32 [#allocation6], 4
      %s30 = int_to_ptr.vmem [resolvable:$true] %s29
      %35 = dma.hbm_to_vmem [thread:$0]  %s28, 1024, %s30, [#allocation3], 128, 128, 8
    $region9: #{tpu_custom_call.1} parent=1 // pred_fallthru
      _
    // Predicated region
    $region10: #{tpu_custom_call.1} parent=1 // pred_check
      _
    $region11: #{tpu_custom_call.1} parent=1 // pred_check_branch
      %37 = sbr.rel (0) target = $region13
    $region12: #{tpu_custom_call.1} parent=1 // pred_region
      %39 = vsyncadd [#allocation8], 0
      %s40 = sshll.u32 %s2, 4
      %s41 = int_to_ptr.hbm [resolvable:$true] %s40
      %s42 = sshll.u32 [#allocation7], 4
      %s43 = int_to_ptr.vmem [resolvable:$true] %s42
      %48 = dma.hbm_to_vmem [thread:$0]  %s41, 512, %s43, [#allocation8], 128, 128, 8
    $region13: #{tpu_custom_call.1} parent=1 // pred_fallthru
      _
    // Predicated region
    $region14: #{tpu_custom_call.1} parent=1 // pred_check
      _
    $region15: #{tpu_custom_call.1} parent=1 // pred_check_branch
      %50 = sbr.rel (0) target = $region17
    $region16: #{tpu_custom_call.1} parent=1 // pred_region
      %52 = vsyncadd [#allocation8], 0
      %s53 = sshll.u32 %s3, 4
      %s54 = int_to_ptr.hbm [resolvable:$true] %s53
      %s55 = sshll.u32 [#allocation9], 4
      %s56 = int_to_ptr.vmem [resolvable:$true] %s55
      %61 = dma.hbm_to_vmem [thread:$0]  %s54, 512, %s56, [#allocation8], 128, 128, 8
    $region17: #{tpu_custom_call.1} parent=1 // pred_fallthru
      _
    // Predicated region
    $region18: #{tpu_custom_call.1} parent=1 // pred_check
      _
    $region19: #{tpu_custom_call.1} parent=1 // pred_check_branch
      %63 = sbr.rel (0) target = $region21
    $region20: #{tpu_custom_call.1} parent=1 // pred_region
      _
    $region21: #{tpu_custom_call.1} parent=1 // pred_fallthru
      _
    // Predicated region
    $region22: #{tpu_custom_call.1} parent=1 // pred_check
      _
    $region23: #{tpu_custom_call.1} parent=1 // pred_check_branch
      %65 = sbr.rel (0) target = $region25
    $region24: #{tpu_custom_call.1} parent=1 // pred_region
      %67 = dma.done [#allocation5], 16
    $region25: #{tpu_custom_call.1} parent=1 // pred_fallthru
      _
    // Predicated region
    $region26: #{tpu_custom_call.1} parent=1 // pred_check
      _
    $region27: #{tpu_custom_call.1} parent=1 // pred_check_branch
      %69 = sbr.rel (0) target = $region29
    $region28: #{tpu_custom_call.1} parent=1 // pred_region
      %71 = dma.done [#allocation3], 1024
    $region29: #{tpu_custom_call.1} parent=1 // pred_fallthru
      _
    // Predicated region
    $region30: #{tpu_custom_call.1} parent=1 // pred_check
      _
    $region31: #{tpu_custom_call.1} parent=1 // pred_check_branch
      %73 = sbr.rel (0) target = $region33
    $region32: #{tpu_custom_call.1} parent=1 // pred_region
      %75 = dma.done [#allocation8], 512
    $region33: #{tpu_custom_call.1} parent=1 // pred_fallthru
      _
    // Predicated region
    $region34: #{tpu_custom_call.1} parent=1 // pred_check
      _
    $region35: #{tpu_custom_call.1} parent=1 // pred_check_branch
      %77 = sbr.rel (0) target = $region37
    $region36: #{tpu_custom_call.1} parent=1 // pred_region
      %79 = dma.done [#allocation8], 512
    $region37: #{tpu_custom_call.1} parent=1 // pred_fallthru
      _
    %80 = sfence
    %v81 = vld [vmem:[#allocation7] sm:$0xff]
    %v82 = vld [vmem:[#allocation7 + $0x8] sm:$0xff]
    %v83 = vld [vmem:[#allocation7 + $0x10] sm:$0xff]
    %v84 = vld [vmem:[#allocation7 + $0x18] sm:$0xff]
    %s85 = sld [smem:[#allocation2]]
    %s86 = scalar_lea.vmem [#allocation6], %s85
    %v87 = vld [vmem:[%s86] sm:$0x1]
    %s88 = sld [smem:[#allocation2 + $0x1]]
    %s89 = scalar_lea.vmem [#allocation6], %s88
    %v90 = vld [vmem:[%s89] sm:$0x1]
    %s91 = sld [smem:[#allocation2 + $0x2]]
    %s92 = scalar_lea.vmem [#allocation6], %s91
    %v93 = vld [vmem:[%s92] sm:$0x1]
    %s94 = sld [smem:[#allocation2 + $0x3]]
    %s95 = scalar_lea.vmem [#allocation6], %s94
    %v96 = vld [vmem:[%s95] sm:$0x1]
    %s97 = sld [smem:[#allocation2 + $0x4]]
    %s98 = scalar_lea.vmem [#allocation6], %s97
    %v99 = vld [vmem:[%s98] sm:$0x1]
    %s100 = sld [smem:[#allocation2 + $0x5]]
    %s101 = scalar_lea.vmem [#allocation6], %s100
    %v102 = vld [vmem:[%s101] sm:$0x1]
    %s103 = sld [smem:[#allocation2 + $0x6]]
    %s104 = scalar_lea.vmem [#allocation6], %s103
    %v105 = vld [vmem:[%s104] sm:$0x1]
    %s106 = sld [smem:[#allocation2 + $0x7]]
    %s107 = scalar_lea.vmem [#allocation6], %s106
    %v108 = vld [vmem:[%s107] sm:$0x1]
    %v109 = vlaneseq
    %v110 = vand.u32 %v109, 127
    %vm111 = vcmp.ge.s32.totalorder %v110, 64
    %vm112 = vcmp.lt.s32.totalorder %v110, 96
    %vm113 = vmand %vm111, %vm112
    %vm114 = vcmask 261120
    %v116 = vsel %vm114, 0.0, 0
    %118 = vmatpush.msra.mxu0 0.0
    %119 = vmatpush.msra.mxu0 0.0
    %120 = vmatpush.msra.mxu0 0.0
    %121 = vmatpush.msra.mxu0 0.0
    %122 = vmatpush.msra.mxu0 0.0
    %123 = vmatpush.msra.mxu0 0.0
    %124 = vmatpush.msra.mxu0 0.0
    %125 = vmatpush.msra.mxu0 0.0
    %126 = vmatpush.msra.mxu0 0.0
    %127 = vmatpush.msra.mxu0 0.0
    %128 = vmatpush.msra.mxu0 0.0
    %129 = vmatpush.msra.mxu0 0.0
    %130 = vmatpush.msra.mxu0 %v84
    %131 = vmatpush.msra.mxu0 %v83
    %132 = vmatpush.msra.mxu0 %v82
    %133 = vmatpush.msra.mxu0 %v81
    %134 = vmatmul.f32.gmra.mxu0 %v116
    %v135 = vpop.f32.mrf.mxu0
    %v136 = vadd.f32 0.0, %v135
    %137 = vdwg.mxu0
    %v138 = vadd.f32 %v87, %v136
    %v139 = vmul.f32 %v138, 0.5
    %v140 = vsel %vm113, %v138, %v139
    %v141 = vtanh.pop %v140
    %v142 = vmul.f32 %v141, 0.5
    %v143 = vadd.f32 %v142, 0.5
    %v144 = vsel %vm113, %v141, %v143
    %v145 = vmul.f32 %v144, 0.0
    %147 = vrot.lane.b32.xlu0 %v144, 64
    %v148 = vpop.permute.xlu0 %147
    %v150 = vmul.f32 %v144, %v148
    %152 = vrot.lane.b32.xlu0 %v150, 32
    %v153 = vpop.permute.xlu0 %152
    %v155 = vadd.f32 %v145, %v153
    %v156 = vtanh.pop %v155
    %158 = vrot.lane.b32.xlu0 %v156, 64
    %v159 = vpop.permute.xlu0 %158
    %v161 = vmul.f32 %v144, %v159
    %163 = vrot.lane.b32.xlu0 %v161, 32
    %v164 = vpop.permute.xlu0 %163
    %v165 = vsel %vm114, %v164, 0
    %167 = vmatpush.msra.mxu0 0.0
    %168 = vmatpush.msra.mxu0 0.0
    %169 = vmatpush.msra.mxu0 0.0
    %170 = vmatpush.msra.mxu0 0.0
    %171 = vmatpush.msra.mxu0 0.0
    %172 = vmatpush.msra.mxu0 0.0
    %173 = vmatpush.msra.mxu0 0.0
    %174 = vmatpush.msra.mxu0 0.0
    %175 = vmatpush.msra.mxu0 0.0
    %176 = vmatpush.msra.mxu0 0.0
    %177 = vmatpush.msra.mxu0 0.0
    %178 = vmatpush.msra.mxu0 0.0
    %179 = vmatpush.msra.mxu0 %v84
    %180 = vmatpush.msra.mxu0 %v83
    %181 = vmatpush.msra.mxu0 %v82
    %182 = vmatpush.msra.mxu0 %v81
    %183 = vmatmul.f32.gmra.mxu0 %v165
    %v184 = vpop.f32.mrf.mxu0
    %v185 = vadd.f32 0.0, %v184
    %186 = vdwg.mxu0
    %v187 = vadd.f32 %v90, %v185
    %v188 = vmul.f32 %v187, 0.5
    %v189 = vsel %vm113, %v187, %v188
    %v190 = vtanh.pop %v189
    %v191 = vmul.f32 %v190, 0.5
    %v192 = vadd.f32 %v191, 0.5
    %v193 = vsel %vm113, %v190, %v192
    %v194 = vmul.f32 %v193, %v155
    %196 = vrot.lane.b32.xlu0 %v193, 64
    %v197 = vpop.permute.xlu0 %196
    %v199 = vmul.f32 %v193, %v197
    %201 = vrot.lane.b32.xlu0 %v199, 32
    %v202 = vpop.permute.xlu0 %201
    %v204 = vadd.f32 %v194, %v202
    %v205 = vtanh.pop %v204
    %207 = vrot.lane.b32.xlu0 %v205, 64
    %v208 = vpop.permute.xlu0 %207
    %v210 = vmul.f32 %v193, %v208
    %212 = vrot.lane.b32.xlu0 %v210, 32
    %v213 = vpop.permute.xlu0 %212
    %v214 = vsel %vm114, %v213, 0
    %216 = vmatpush.msra.mxu0 0.0
    %217 = vmatpush.msra.mxu0 0.0
    %218 = vmatpush.msra.mxu0 0.0
    %219 = vmatpush.msra.mxu0 0.0
    %220 = vmatpush.msra.mxu0 0.0
    %221 = vmatpush.msra.mxu0 0.0
    %222 = vmatpush.msra.mxu0 0.0
    %223 = vmatpush.msra.mxu0 0.0
    %224 = vmatpush.msra.mxu0 0.0
    %225 = vmatpush.msra.mxu0 0.0
    %226 = vmatpush.msra.mxu0 0.0
    %227 = vmatpush.msra.mxu0 0.0
    %228 = vmatpush.msra.mxu0 %v84
    %229 = vmatpush.msra.mxu0 %v83
    %230 = vmatpush.msra.mxu0 %v82
    %231 = vmatpush.msra.mxu0 %v81
    %232 = vmatmul.f32.gmra.mxu0 %v214
    %v233 = vpop.f32.mrf.mxu0
    %v234 = vadd.f32 0.0, %v233
    %235 = vdwg.mxu0
    %v236 = vadd.f32 %v93, %v234
    %v237 = vmul.f32 %v236, 0.5
    %v238 = vsel %vm113, %v236, %v237
    %v239 = vtanh.pop %v238
    %v240 = vmul.f32 %v239, 0.5
    %v241 = vadd.f32 %v240, 0.5
    %v242 = vsel %vm113, %v239, %v241
    %v243 = vmul.f32 %v242, %v204
    %245 = vrot.lane.b32.xlu0 %v242, 64
    %v246 = vpop.permute.xlu0 %245
    %v248 = vmul.f32 %v242, %v246
    %250 = vrot.lane.b32.xlu0 %v248, 32
    %v251 = vpop.permute.xlu0 %250
    %v253 = vadd.f32 %v243, %v251
    %v254 = vtanh.pop %v253
    %256 = vrot.lane.b32.xlu0 %v254, 64
    %v257 = vpop.permute.xlu0 %256
    %v259 = vmul.f32 %v242, %v257
    %261 = vrot.lane.b32.xlu0 %v259, 32
    %v262 = vpop.permute.xlu0 %261
    %v263 = vsel %vm114, %v262, 0
    %265 = vmatpush.msra.mxu0 0.0
    %266 = vmatpush.msra.mxu0 0.0
    %267 = vmatpush.msra.mxu0 0.0
    %268 = vmatpush.msra.mxu0 0.0
    %269 = vmatpush.msra.mxu0 0.0
    %270 = vmatpush.msra.mxu0 0.0
    %271 = vmatpush.msra.mxu0 0.0
    %272 = vmatpush.msra.mxu0 0.0
    %273 = vmatpush.msra.mxu0 0.0
    %274 = vmatpush.msra.mxu0 0.0
    %275 = vmatpush.msra.mxu0 0.0
    %276 = vmatpush.msra.mxu0 0.0
    %277 = vmatpush.msra.mxu0 %v84
    %278 = vmatpush.msra.mxu0 %v83
    %279 = vmatpush.msra.mxu0 %v82
    %280 = vmatpush.msra.mxu0 %v81
    %281 = vmatmul.f32.gmra.mxu0 %v263
    %v282 = vpop.f32.mrf.mxu0
    %v283 = vadd.f32 0.0, %v282
    %284 = vdwg.mxu0
    %v285 = vadd.f32 %v96, %v283
    %v286 = vmul.f32 %v285, 0.5
    %v287 = vsel %vm113, %v285, %v286
    %v288 = vtanh.pop %v287
    %v289 = vmul.f32 %v288, 0.5
    %v290 = vadd.f32 %v289, 0.5
    %v291 = vsel %vm113, %v288, %v290
    %v292 = vmul.f32 %v291, %v253
    %294 = vrot.lane.b32.xlu0 %v291, 64
    %v295 = vpop.permute.xlu0 %294
    %v297 = vmul.f32 %v291, %v295
    %299 = vrot.lane.b32.xlu0 %v297, 32
    %v300 = vpop.permute.xlu0 %299
    %v302 = vadd.f32 %v292, %v300
    %v303 = vtanh.pop %v302
    %305 = vrot.lane.b32.xlu0 %v303, 64
    %v306 = vpop.permute.xlu0 %305
    %v308 = vmul.f32 %v291, %v306
    %310 = vrot.lane.b32.xlu0 %v308, 32
    %v311 = vpop.permute.xlu0 %310
    %v312 = vsel %vm114, %v311, 0
    %314 = vmatpush.msra.mxu0 0.0
    %315 = vmatpush.msra.mxu0 0.0
    %316 = vmatpush.msra.mxu0 0.0
    %317 = vmatpush.msra.mxu0 0.0
    %318 = vmatpush.msra.mxu0 0.0
    %319 = vmatpush.msra.mxu0 0.0
    %320 = vmatpush.msra.mxu0 0.0
    %321 = vmatpush.msra.mxu0 0.0
    %322 = vmatpush.msra.mxu0 0.0
    %323 = vmatpush.msra.mxu0 0.0
    %324 = vmatpush.msra.mxu0 0.0
    %325 = vmatpush.msra.mxu0 0.0
    %326 = vmatpush.msra.mxu0 %v84
    %327 = vmatpush.msra.mxu0 %v83
    %328 = vmatpush.msra.mxu0 %v82
    %329 = vmatpush.msra.mxu0 %v81
    %330 = vmatmul.f32.gmra.mxu0 %v312
    %v331 = vpop.f32.mrf.mxu0
    %v332 = vadd.f32 0.0, %v331
    %333 = vdwg.mxu0
    %v334 = vadd.f32 %v99, %v332
    %v335 = vmul.f32 %v334, 0.5
    %v336 = vsel %vm113, %v334, %v335
    %v337 = vtanh.pop %v336
    %v338 = vmul.f32 %v337, 0.5
    %v339 = vadd.f32 %v338, 0.5
    %v340 = vsel %vm113, %v337, %v339
    %v341 = vmul.f32 %v340, %v302
    %343 = vrot.lane.b32.xlu0 %v340, 64
    %v344 = vpop.permute.xlu0 %343
    %v346 = vmul.f32 %v340, %v344
    %348 = vrot.lane.b32.xlu0 %v346, 32
    %v349 = vpop.permute.xlu0 %348
    %v351 = vadd.f32 %v341, %v349
    %v352 = vtanh.pop %v351
    %354 = vrot.lane.b32.xlu0 %v352, 64
    %v355 = vpop.permute.xlu0 %354
    %v357 = vmul.f32 %v340, %v355
    %359 = vrot.lane.b32.xlu0 %v357, 32
    %v360 = vpop.permute.xlu0 %359
    %v361 = vsel %vm114, %v360, 0
    %363 = vmatpush.msra.mxu0 0.0
    %364 = vmatpush.msra.mxu0 0.0
    %365 = vmatpush.msra.mxu0 0.0
    %366 = vmatpush.msra.mxu0 0.0
    %367 = vmatpush.msra.mxu0 0.0
    %368 = vmatpush.msra.mxu0 0.0
    %369 = vmatpush.msra.mxu0 0.0
    %370 = vmatpush.msra.mxu0 0.0
    %371 = vmatpush.msra.mxu0 0.0
    %372 = vmatpush.msra.mxu0 0.0
    %373 = vmatpush.msra.mxu0 0.0
    %374 = vmatpush.msra.mxu0 0.0
    %375 = vmatpush.msra.mxu0 %v84
    %376 = vmatpush.msra.mxu0 %v83
    %377 = vmatpush.msra.mxu0 %v82
    %378 = vmatpush.msra.mxu0 %v81
    %379 = vmatmul.f32.gmra.mxu0 %v361
    %v380 = vpop.f32.mrf.mxu0
    %v381 = vadd.f32 0.0, %v380
    %382 = vdwg.mxu0
    %v383 = vadd.f32 %v102, %v381
    %v384 = vmul.f32 %v383, 0.5
    %v385 = vsel %vm113, %v383, %v384
    %v386 = vtanh.pop %v385
    %v387 = vmul.f32 %v386, 0.5
    %v388 = vadd.f32 %v387, 0.5
    %v389 = vsel %vm113, %v386, %v388
    %v390 = vmul.f32 %v389, %v351
    %392 = vrot.lane.b32.xlu0 %v389, 64
    %v393 = vpop.permute.xlu0 %392
    %v395 = vmul.f32 %v389, %v393
    %397 = vrot.lane.b32.xlu0 %v395, 32
    %v398 = vpop.permute.xlu0 %397
    %v400 = vadd.f32 %v390, %v398
    %v401 = vtanh.pop %v400
    %403 = vrot.lane.b32.xlu0 %v401, 64
    %v404 = vpop.permute.xlu0 %403
    %v406 = vmul.f32 %v389, %v404
    %408 = vrot.lane.b32.xlu0 %v406, 32
    %v409 = vpop.permute.xlu0 %408
    %v410 = vsel %vm114, %v409, 0
    %412 = vmatpush.msra.mxu0 0.0
    %413 = vmatpush.msra.mxu0 0.0
    %414 = vmatpush.msra.mxu0 0.0
    %415 = vmatpush.msra.mxu0 0.0
    %416 = vmatpush.msra.mxu0 0.0
    %417 = vmatpush.msra.mxu0 0.0
    %418 = vmatpush.msra.mxu0 0.0
    %419 = vmatpush.msra.mxu0 0.0
    %420 = vmatpush.msra.mxu0 0.0
    %421 = vmatpush.msra.mxu0 0.0
    %422 = vmatpush.msra.mxu0 0.0
    %423 = vmatpush.msra.mxu0 0.0
    %424 = vmatpush.msra.mxu0 %v84
    %425 = vmatpush.msra.mxu0 %v83
    %426 = vmatpush.msra.mxu0 %v82
    %427 = vmatpush.msra.mxu0 %v81
    %428 = vmatmul.f32.gmra.mxu0 %v410
    %v429 = vpop.f32.mrf.mxu0
    %v430 = vadd.f32 0.0, %v429
    %431 = vdwg.mxu0
    %v432 = vadd.f32 %v105, %v430
    %v433 = vmul.f32 %v432, 0.5
    %v434 = vsel %vm113, %v432, %v433
    %v435 = vtanh.pop %v434
    %v436 = vmul.f32 %v435, 0.5
    %v437 = vadd.f32 %v436, 0.5
    %v438 = vsel %vm113, %v435, %v437
    %v439 = vmul.f32 %v438, %v400
    %441 = vrot.lane.b32.xlu0 %v438, 64
    %v442 = vpop.permute.xlu0 %441
    %v444 = vmul.f32 %v438, %v442
    %446 = vrot.lane.b32.xlu0 %v444, 32
    %v447 = vpop.permute.xlu0 %446
    %v449 = vadd.f32 %v439, %v447
    %v450 = vtanh.pop %v449
    %452 = vrot.lane.b32.xlu0 %v450, 64
    %v453 = vpop.permute.xlu0 %452
    %v455 = vmul.f32 %v438, %v453
    %457 = vrot.lane.b32.xlu0 %v455, 32
    %v458 = vpop.permute.xlu0 %457
    %v459 = vsel %vm114, %v458, 0
    %461 = vmatpush.msra.mxu0 0.0
    %462 = vmatpush.msra.mxu0 0.0
    %463 = vmatpush.msra.mxu0 0.0
    %464 = vmatpush.msra.mxu0 0.0
    %465 = vmatpush.msra.mxu0 0.0
    %466 = vmatpush.msra.mxu0 0.0
    %467 = vmatpush.msra.mxu0 0.0
    %468 = vmatpush.msra.mxu0 0.0
    %469 = vmatpush.msra.mxu0 0.0
    %470 = vmatpush.msra.mxu0 0.0
    %471 = vmatpush.msra.mxu0 0.0
    %472 = vmatpush.msra.mxu0 0.0
    %473 = vmatpush.msra.mxu0 %v84
    %474 = vmatpush.msra.mxu0 %v83
    %475 = vmatpush.msra.mxu0 %v82
    %476 = vmatpush.msra.mxu0 %v81
    %477 = vmatmul.f32.gmra.mxu0 %v459
    %v478 = vpop.f32.mrf.mxu0
    %v479 = vadd.f32 0.0, %v478
    %480 = vdwg.mxu0
    %v481 = vadd.f32 %v108, %v479
    %v482 = vmul.f32 %v481, 0.5
    %v483 = vsel %vm113, %v481, %v482
    %v484 = vtanh.pop %v483
    %v485 = vmul.f32 %v484, 0.5
    %v486 = vadd.f32 %v485, 0.5
    %v487 = vsel %vm113, %v484, %v486
    %v488 = vmul.f32 %v487, %v449
    %490 = vrot.lane.b32.xlu0 %v487, 64
    %v491 = vpop.permute.xlu0 %490
    %v493 = vmul.f32 %v487, %v491
    %495 = vrot.lane.b32.xlu0 %v493, 32
    %v496 = vpop.permute.xlu0 %495
    %v498 = vadd.f32 %v488, %v496
    %v499 = vtanh.pop %v498
    %501 = vrot.lane.b32.xlu0 %v499, 64
    %v502 = vpop.permute.xlu0 %501
    %v504 = vmul.f32 %v487, %v502
    %v505 = vld [vmem:[#allocation9] sm:$0xff]
    %v506 = vld [vmem:[#allocation9 + $0x8] sm:$0xff]
    %v507 = vld [vmem:[#allocation9 + $0x10] sm:$0xff]
    %v508 = vld [vmem:[#allocation9 + $0x18] sm:$0xff]
    %v509 = vld [vmem:[%s4] sm:$0x1]
    %511 = vrot.lane.b32.xlu0 %v504, 32
    %v512 = vpop.permute.xlu0 %511
    %v513 = vsel %vm114, %v512, 0
    %515 = vmatpush.msra.mxu0 0.0
    %516 = vmatpush.msra.mxu0 0.0
    %517 = vmatpush.msra.mxu0 0.0
    %518 = vmatpush.msra.mxu0 0.0
    %519 = vmatpush.msra.mxu0 0.0
    %520 = vmatpush.msra.mxu0 0.0
    %521 = vmatpush.msra.mxu0 0.0
    %522 = vmatpush.msra.mxu0 0.0
    %523 = vmatpush.msra.mxu0 0.0
    %524 = vmatpush.msra.mxu0 0.0
    %525 = vmatpush.msra.mxu0 0.0
    %526 = vmatpush.msra.mxu0 0.0
    %527 = vmatpush.msra.mxu0 %v508
    %528 = vmatpush.msra.mxu0 %v507
    %529 = vmatpush.msra.mxu0 %v506
    %530 = vmatpush.msra.mxu0 %v505
    %531 = vmatmul.f32.gmra.mxu0 %v513
    %v532 = vpop.f32.mrf.mxu0
    %v533 = vadd.f32 %v509, %v532
    %534 = vdwg.mxu0
    %vm535 = vcmask 1040384
    %v536 = vsel %vm535, %v533, -inf
    %537 = vmax.xlane.f32.xlu0 %v536
    %v538 = vpop.xlane.xlu0 %537
    %v539 = vsub.f32 %v533, %v538
    %v540 = vmul.f32 %v539, 1.442695
    %v541 = vpow.pop %v540
    %v542 = vsel %vm535, %v541, 0.0
    %543 = vadd.xlane.f32.xlu0 %v542
    %v544 = vpop.xlane.xlu0 %543
    %v545 = vlog2.pop %v544
    %v546 = vmul.f32 %v545, 0.6931472
    %v547 = vsub.f32 %v539, %v546
    %548 = vst [vmem:[#allocation10] sm:$0x1] %v547
    // Predicated region
    $region38: #{tpu_custom_call.1} parent=1 // pred_check
      _
    $region39: #{tpu_custom_call.1} parent=1 // pred_check_branch
      %550 = sbr.rel (0) target = $region41
    $region40: #{tpu_custom_call.1} parent=1 // pred_region
      %552 = vsyncadd [#allocation4], 0
      %s554 = sshll.u32 [#allocation10], 4
      %s555 = int_to_ptr.vmem [resolvable:$true] %s554
      %s556 = sshll.u32 %s5, 4
      %s557 = int_to_ptr.hbm [resolvable:$true] %s556
      %559 = dma.vmem_to_hbm [thread:$0]  %s555, 16, %s557, [#allocation4]
    $region41: #{tpu_custom_call.1} parent=1 // pred_fallthru
      _
    // Predicated region
    $region42: #{tpu_custom_call.1} parent=1 // pred_check
      _
    $region43: #{tpu_custom_call.1} parent=1 // pred_check_branch
      %561 = sbr.rel (0) target = $region45
    $region44: #{tpu_custom_call.1} parent=1 // pred_region
      %563 = dma.done [#allocation4], 16
    $region45: #{tpu_custom_call.1} parent=1 // pred_fallthru
      _
    %564 = vsyncpa [#allocation3], 1
    %565 = vsyncpa [#allocation8], 1
    %566 = vsyncpa [#allocation4], 1
    %567 = vsyncpa [#allocation5], 1

</llo_original>
